<compile_context>
chip_gen: v5e
topology: v5e:2x2
jax: 0.10.0
libtpu: 0.0.40
codegen_flags: <defaults>
</compile_context>

<pallas_src>
import math

import jax
import jax.numpy as jnp
from jax.experimental import pallas as pl
from jax.experimental.pallas import tpu as pltpu


def _round_up(x, m):
    return ((x + m - 1) // m) * m


def _tpu_chip_info():
    """Best-effort (tensorcores_per_chip, physical_vmem_bytes_per_core)."""
    ncores, vmem = 1, 128 << 20              # v5e / v6e defaults (1 TC, 128 MiB)
    try:
        kind = jax.devices()[0].device_kind.lower()
        if "v7" in kind:                     # v7x-class: 2 TCs, 64 MiB VMEM per TC
            ncores, vmem = 2, 64 << 20
    except Exception:
        pass
    try:                                     # refine VMEM from the runtime if exposed
        info = pltpu.get_tpu_info()
        vmem = int(getattr(info, "vmem_capacity_bytes", vmem))
    except Exception:
        pass
    return ncores, vmem


def _ham_block(x, z, w, w_t, b, h, out_dtype):
    """One Hamiltonian step on a row sub-tile.

    x : (r, F), z : (r, W) or None (== zeros), w : (F, W), w_t : (W, F).
    Matmuls run in the operands' native dtype with f32 accumulation; the
    tanh/axpy tail runs in f32.  (For bf16 weights the intermediate z_new is
    rounded to bf16 before the second matmul -- documented precision tradeoff.)
    """
    dz = jnp.tanh(jnp.dot(x, w, preferred_element_type=jnp.float32) + b)
    if z is None:
        z_new = -h * dz                      # z == 0: never allocate/stream zeros
    else:
        z_new = z.astype(jnp.float32) - h * dz
    dx = jnp.tanh(jnp.dot(z_new.astype(w_t.dtype), w_t,
                          preferred_element_type=jnp.float32) + b)
    x_new = x.astype(jnp.float32) + h * dx
    return x_new.astype(out_dtype), z_new.astype(out_dtype)


def _ham_kernel_full(xz_ref, w_ref, wt_ref, s_ref, out_ref):
    """xz tile carries both x ([:, :F]) and z ([:, F:]); fused (tb, F+W) output."""
    F = w_ref.shape[0]
    w = w_ref[...]                           # (F, W), grid-resident
    w_t = wt_ref[...]                        # (W, F), grid-resident
    b = s_ref[0]                             # scalar bias   (SMEM)
    h = s_ref[1]                             # scalar step h (SMEM)

    tb = xz_ref.shape[0]
    # Static 2-way row split so the two independent matmul->tanh->axpy chains
    # can interleave on MXU/EUP/VPU.  Only when the tile is large enough for
    # the split to matter; at small tb it is pure overhead.
    n_sub = 2 if (tb >= 256 and tb % 16 == 0) else 1
    rows = tb // n_sub
    for s in range(n_sub):
        r0, r1 = s * rows, (s + 1) * rows
        x = xz_ref[r0:r1, :F]
        z = xz_ref[r0:r1, F:]
        x_new, z_new = _ham_block(x, z, w, w_t, b, h, out_ref.dtype)
        out_ref[r0:r1, :F] = x_new
        out_ref[r0:r1, F:] = z_new


def _ham_kernel_xonly(x_ref, w_ref, wt_ref, s_ref, out_ref):
    """xz has only F columns: z starts at 0 (no (B, W) zeros streamed)."""
    F = w_ref.shape[0]
    w = w_ref[...]
    w_t = wt_ref[...]
    b = s_ref[0]
    h = s_ref[1]

    tb = x_ref.shape[0]
    n_sub = 2 if (tb >= 256 and tb % 16 == 0) else 1
    rows = tb // n_sub
    for s in range(n_sub):
        r0, r1 = s * rows, (s + 1) * rows
        x = x_ref[r0:r1, :]
        x_new, z_new = _ham_block(x, None, w, w_t, b, h, out_ref.dtype)
        out_ref[r0:r1, :F] = x_new
        out_ref[r0:r1, F:] = z_new


def hamiltonian_layer(xz, weight, bias=None, h=1.0, tb=None, alias_input=False):
    """Pallas-backed HamiltonianLayer.forward.

    xz     : (B, F) or (B, F+W)
    weight : (F, W)
    bias   : (1,) or None
    tb     : optional cap on the batch-tile rows (default: VMEM-budgeted max)
    alias_input : reuse the xz buffer for the output when shapes match
                  (only safe if the caller does not reuse xz afterwards).
    """
    F, W = weight.shape
    B, C = xz.shape
    if C not in (F, F + W):
        raise ValueError(f"xz has {C} columns; expected {F} or {F + W}")
    O = F + W

    ncores, phys_vmem = _tpu_chip_info()

    # --- VMEM-budgeted batch tile -------------------------------------------
    itemsize = jnp.dtype(xz.dtype).itemsize
    w_item = jnp.dtype(weight.dtype).itemsize
    in_row = _round_up(C, 128) * itemsize                 # one input row, lane-padded
    out_row = _round_up(O, 128) * itemsize                # one output row, lane-padded
    # Weight buffers (budgeted conservatively as double-buffered even though we
    # request Buffered(1)): w (F,W) and w_t (W,F).
    weights_foot = 2 * (_round_up(F, 8) * _round_up(W, 128)
                        + _round_up(W, 8) * _round_up(F, 128)) * w_item
    row_bytes = 2 * (in_row + out_row)                    # double-buffered in + out
    tile_budget = phys_vmem // 2                          # headroom for compiler scratch
    tb_vmem = max(8, (tile_budget - weights_foot) // row_bytes)

    tb = B if tb is None else min(int(tb), B)
    tb = min(tb, int(tb_vmem), B)

    # Megacore split only on multi-TC (v7x-class) parts, only for large batches,
    # and with an even 2-way split so both TensorCores stay balanced.
    # 1-TC parts (v5e/v6e) keep one maximal tile: no gratuitous per-step overhead.
    if ncores > 1 and tb == B and B >= 512 and B % 16 == 0:
        tb = B // 2
    if tb < B:
        tb = max(8, (tb // 8) * 8)                        # sublane-aligned tiles
    grid = (pl.cdiv(B, tb),)

    needed = weights_foot + row_bytes * tb + (1 << 20)
    vmem_limit = int(min(phys_vmem - (8 << 20), max(needed, 32 << 20)))

    # --- scalars in SMEM (no recompile when h / bias change) -----------------
    b_scalar = (jnp.zeros((), jnp.float32) if bias is None
                else jnp.reshape(bias, ()).astype(jnp.float32))
    h_scalar = jnp.asarray(h, jnp.float32)
    scalars = jnp.stack([b_scalar, h_scalar])

    # One-time transpose in the wrapper: both in-kernel matmuls are canonical
    # jnp.dot (no per-grid-step XLU transpose of the weight).
    weight_t = jnp.transpose(weight)                      # (W, F)

    kernel = _ham_kernel_full if C == O else _ham_kernel_xonly
    io_aliases = {0: 0} if (alias_input and C == O) else {}

    def call(buffered_weights):
        def wspec(shape):
            if buffered_weights:
                # Constant index_map -> never re-DMAs; single buffer halves its
                # VMEM reservation (matters at production F, W, esp. on v7x).
                return pl.BlockSpec(shape, lambda i: (0, 0),
                                    pipeline_mode=pl.Buffered(1))
            return pl.BlockSpec(shape, lambda i: (0, 0))

        return pl.pallas_call(
            kernel,
            out_shape=jax.ShapeDtypeStruct((B, O), xz.dtype),
            grid_spec=pltpu.PrefetchScalarGridSpec(
                num_scalar_prefetch=0,
                grid=grid,
                in_specs=[
                    pl.BlockSpec((tb, C), lambda i: (i, 0)),           # xz tile
                    wspec((F, W)),                                      # weight
                    wspec((W, F)),                                      # weight.T
                    pl.BlockSpec(memory_space=pltpu.MemorySpace.SMEM),  # [bias, h]
                ],
                out_specs=pl.BlockSpec((tb, O), lambda i: (i, 0)),      # fused x|z
            ),
            input_output_aliases=io_aliases,
            compiler_params=pltpu.CompilerParams(
                dimension_semantics=("parallel",),
                vmem_limit_bytes=vmem_limit),
        )(xz, weight, weight_t, scalars)

    try:
        return call(True)
    except Exception:
        # Fallback for JAX versions where pipeline_mode=pl.Buffered(1) is not
        # accepted on a pipelined BlockSpec; semantics are identical.
        return call(False)


def _reference(xz, weight, bias, h=1.0):
    F, W = weight.shape
    if xz.shape[1] == F:
        x = xz
        z = jnp.zeros((xz.shape[0], W), dtype=xz.dtype)
    else:
        x = xz[:, :F]
        z = xz[:, F:]
    b = 0.0 if bias is None else bias
    dz = jnp.tanh(x @ weight + b)
    z = z - h * dz
    dx = jnp.tanh(z @ weight.T + b)
    x = x + h * dx
    return jnp.concatenate([x, z], axis=1)


if __name__ == "__main__":
    # batch, in_features (= layer.out_features), width (= layer.in_features)
    B, F, W = 64, 32, 16
    h = 0.5
    dtype = jnp.float32

    key = jax.random.PRNGKey(0)
    k_w, k_b, k_x1, k_x2 = jax.random.split(key, 4)

    # Deterministic init matching reset_parameters():
    #   kaiming_uniform_(weight, a=sqrt(5)) -> U(-1/sqrt(fan_in), 1/sqrt(fan_in)), fan_in = W
    #   bias ~ U(-1/sqrt(fan_in), 1/sqrt(fan_in)), shape (1,)
    bound = 1.0 / math.sqrt(W)
    weight = jax.random.uniform(k_w, (F, W), dtype, minval=-bound, maxval=bound)
    bias = jax.random.uniform(k_b, (1,), dtype, minval=-bound, maxval=bound)

    # Case 1: xz has F + W columns (x and z provided)
    xz_full = jax.random.normal(k_x1, (B, F + W), dtype)
    out_full = jax.block_until_ready(hamiltonian_layer(xz_full, weight, bias, h=h))
    ref_full = _reference(xz_full, weight, bias, h=h)

    # Case 2: xz has only F columns (z starts at zero)
    xz_x = jax.random.normal(k_x2, (B, F), dtype)
    out_x = jax.block_until_ready(hamiltonian_layer(xz_x, weight, bias, h=h))
    ref_x = _reference(xz_x, weight, bias, h=h)

    # Case 3: no bias
    out_nb = jax.block_until_ready(hamiltonian_layer(xz_full, weight, None, h=h))
    ref_nb = _reference(xz_full, weight, None, h=h)

    assert out_full.shape == (B, F + W)
    assert out_x.shape == (B, F + W)
    assert jnp.allclose(out_full, ref_full, atol=1e-5, rtol=1e-5)
    assert jnp.allclose(out_x, ref_x, atol=1e-5, rtol=1e-5)
    assert jnp.allclose(out_nb, ref_nb, atol=1e-5, rtol=1e-5)

    print("KERNEL_OK")
</pallas_src>

<mosaic_0001>
module attributes {stable_mosaic.version = 11 : i64} {
  func.func @_ham_kernel_full(%arg0: i32, %arg1: memref<64x48xf32, #tpu.memory_space<vmem>>, %arg2: memref<32x16xf32, #tpu.memory_space<vmem>>, %arg3: memref<16x32xf32, #tpu.memory_space<vmem>>, %arg4: memref<2xf32, #tpu.memory_space<smem>>, %arg5: memref<64x48xf32, #tpu.memory_space<vmem>>) attributes {dimension_semantics = [#tpu.dimension_semantics<parallel>], iteration_bounds = array<i64: 1>, scalar_prefetch = 0 : i64, scratch_operands = 0 : i64, tpu.core_type = #tpu.core_type<tc>, window_params = [{transform_indices = @transform_0, window_bounds = array<i64: 64, 48>}, {pipeline_mode = #tpu.pipeline_mode<synchronous>, transform_indices = @transform_1, window_bounds = array<i64: 32, 16>}, {pipeline_mode = #tpu.pipeline_mode<synchronous>, transform_indices = @transform_2, window_bounds = array<i64: 16, 32>}, {transform_indices = @transform_3, window_bounds = array<i64: 2>}, {transform_indices = @transform_4, window_bounds = array<i64: 64, 48>}]} {
    %c0 = arith.constant 0 : index
    %c0_0 = arith.constant 0 : index
    %0 = vector.load %arg2[%c0, %c0_0] : memref<32x16xf32, #tpu.memory_space<vmem>>, vector<32x16xf32>
    %c0_1 = arith.constant 0 : index
    %c0_2 = arith.constant 0 : index
    %1 = vector.load %arg3[%c0_1, %c0_2] : memref<16x32xf32, #tpu.memory_space<vmem>>, vector<16x32xf32>
    %c0_3 = arith.constant 0 : index
    %2 = memref.load %arg4[%c0_3] : memref<2xf32, #tpu.memory_space<smem>>
    %c1 = arith.constant 1 : index
    %3 = memref.load %arg4[%c1] : memref<2xf32, #tpu.memory_space<smem>>
    %c0_4 = arith.constant 0 : index
    %c0_5 = arith.constant 0 : index
    %4 = vector.load %arg1[%c0_4, %c0_5] : memref<64x48xf32, #tpu.memory_space<vmem>>, vector<64x32xf32>
    %c0_6 = arith.constant 0 : index
    %c32 = arith.constant 32 : index
    %5 = vector.load %arg1[%c0_6, %c32] : memref<64x48xf32, #tpu.memory_space<vmem>>, vector<64x16xf32>
    %cst = arith.constant dense<0.000000e+00> : vector<64x16xf32>
    %6 = tpu.matmul %4, %0, %cst {dimension_numbers = #tpu.dot_dimension_numbers<[1], [0], [0], [1], [0, 0, 1, 1], [], []>} : vector<64x32xf32>, vector<32x16xf32>, vector<64x16xf32> -> vector<64x16xf32>
    %7 = vector.broadcast %2 : f32 to vector<64x16xf32>
    %8 = arith.addf %6, %7 : vector<64x16xf32>
    %9 = math.tanh %8 : vector<64x16xf32>
    %10 = vector.broadcast %3 : f32 to vector<64x16xf32>
    %11 = arith.mulf %10, %9 : vector<64x16xf32>
    %12 = arith.subf %5, %11 : vector<64x16xf32>
    %cst_7 = arith.constant dense<0.000000e+00> : vector<64x32xf32>
    %13 = tpu.matmul %12, %1, %cst_7 {dimension_numbers = #tpu.dot_dimension_numbers<[1], [0], [0], [1], [0, 0, 1, 1], [], []>} : vector<64x16xf32>, vector<16x32xf32>, vector<64x32xf32> -> vector<64x32xf32>
    %14 = vector.broadcast %2 : f32 to vector<64x32xf32>
    %15 = arith.addf %13, %14 : vector<64x32xf32>
    %16 = math.tanh %15 : vector<64x32xf32>
    %17 = vector.broadcast %3 : f32 to vector<64x32xf32>
    %18 = arith.mulf %17, %16 : vector<64x32xf32>
    %19 = arith.addf %4, %18 : vector<64x32xf32>
    %c0_8 = arith.constant 0 : index
    %c0_9 = arith.constant 0 : index
    %20 = vector.load %arg5[%c0_8, %c0_9] : memref<64x48xf32, #tpu.memory_space<vmem>>, vector<64x32xf32>
    tpu.vector_store %arg5[%c0_8, %c0_9], %19 {strides = array<i32>} : memref<64x48xf32, #tpu.memory_space<vmem>>, vector<64x32xf32>,
    %c0_10 = arith.constant 0 : index
    %c32_11 = arith.constant 32 : index
    %21 = vector.load %arg5[%c0_10, %c32_11] : memref<64x48xf32, #tpu.memory_space<vmem>>, vector<64x16xf32>
    tpu.vector_store %arg5[%c0_10, %c32_11], %12 {strides = array<i32>} : memref<64x48xf32, #tpu.memory_space<vmem>>, vector<64x16xf32>,
    return
  }
  func.func @transform_0(%arg0: i32) -> (i32, i32) {
    %c0_i32 = arith.constant 0 : i32
    %c0_i32_0 = arith.constant 0 : i32
    return %arg0, %c0_i32 : i32, i32
  }
  func.func @transform_1(%arg0: i32) -> (i32, i32) {
    %c0_i32 = arith.constant 0 : i32
    %c0_i32_0 = arith.constant 0 : i32
    %c0_i32_1 = arith.constant 0 : i32
    return %c0_i32, %c0_i32_0 : i32, i32
  }
  func.func @transform_2(%arg0: i32) -> (i32, i32) {
    %c0_i32 = arith.constant 0 : i32
    %c0_i32_0 = arith.constant 0 : i32
    %c0_i32_1 = arith.constant 0 : i32
    return %c0_i32, %c0_i32_0 : i32, i32
  }
  func.func @transform_3(%arg0: i32) -> i32 {
    %c0_i32 = arith.constant 0 : i32
    %c0_i32_0 = arith.constant 0 : i32
    return %c0_i32 : i32
  }
  func.func @transform_4(%arg0: i32) -> (i32, i32) {
    %c0_i32 = arith.constant 0 : i32
    %c0_i32_0 = arith.constant 0 : i32
    return %arg0, %c0_i32 : i32, i32
  }
}

module attributes {stable_mosaic.version = 11 : i64} {
  func.func @_ham_kernel_full(%arg0: i32, %arg1: memref<64x48xf32, #tpu.memory_space<vmem>>, %arg2: memref<32x16xf32, #tpu.memory_space<vmem>>, %arg3: memref<16x32xf32, #tpu.memory_space<vmem>>, %arg4: memref<2xf32, #tpu.memory_space<smem>>, %arg5: memref<64x48xf32, #tpu.memory_space<vmem>>) attributes {dimension_semantics = [#tpu.dimension_semantics<parallel>], iteration_bounds = array<i64: 1>, scalar_prefetch = 0 : i64, scratch_operands = 0 : i64, tpu.core_type = #tpu.core_type<tc>, window_params = [{transform_indices = @transform_0, window_bounds = array<i64: 64, 48>}, {pipeline_mode = #tpu.pipeline_mode<synchronous>, transform_indices = @transform_1, window_bounds = array<i64: 32, 16>}, {pipeline_mode = #tpu.pipeline_mode<synchronous>, transform_indices = @transform_2, window_bounds = array<i64: 16, 32>}, {transform_indices = @transform_3, window_bounds = array<i64: 2>}, {transform_indices = @transform_4, window_bounds = array<i64: 64, 48>}]} {
    %c0 = arith.constant 0 : index
    %c0_0 = arith.constant 0 : index
    %0 = vector.load %arg2[%c0, %c0_0] : memref<32x16xf32, #tpu.memory_space<vmem>>, vector<32x16xf32>
    %c0_1 = arith.constant 0 : index
    %c0_2 = arith.constant 0 : index
    %1 = vector.load %arg3[%c0_1, %c0_2] : memref<16x32xf32, #tpu.memory_space<vmem>>, vector<16x32xf32>
    %c0_3 = arith.constant 0 : index
    %2 = memref.load %arg4[%c0_3] : memref<2xf32, #tpu.memory_space<smem>>
    %c1 = arith.constant 1 : index
    %3 = memref.load %arg4[%c1] : memref<2xf32, #tpu.memory_space<smem>>
    %c0_4 = arith.constant 0 : index
    %c0_5 = arith.constant 0 : index
    %4 = vector.load %arg1[%c0_4, %c0_5] : memref<64x48xf32, #tpu.memory_space<vmem>>, vector<64x32xf32>
    %c0_6 = arith.constant 0 : index
    %c32 = arith.constant 32 : index
    %5 = vector.load %arg1[%c0_6, %c32] : memref<64x48xf32, #tpu.memory_space<vmem>>, vector<64x16xf32>
    %cst = arith.constant dense<0.000000e+00> : vector<64x16xf32>
    %6 = tpu.matmul %4, %0, %cst {dimension_numbers = #tpu.dot_dimension_numbers<[1], [0], [0], [1], [0, 0, 1, 1], [], []>} : vector<64x32xf32>, vector<32x16xf32>, vector<64x16xf32> -> vector<64x16xf32>
    %7 = vector.broadcast %2 : f32 to vector<64x16xf32>
    %8 = arith.addf %6, %7 : vector<64x16xf32>
    %9 = math.tanh %8 : vector<64x16xf32>
    %10 = vector.broadcast %3 : f32 to vector<64x16xf32>
    %11 = arith.mulf %10, %9 : vector<64x16xf32>
    %12 = arith.subf %5, %11 : vector<64x16xf32>
    %cst_7 = arith.constant dense<0.000000e+00> : vector<64x32xf32>
    %13 = tpu.matmul %12, %1, %cst_7 {dimension_numbers = #tpu.dot_dimension_numbers<[1], [0], [0], [1], [0, 0, 1, 1], [], []>} : vector<64x16xf32>, vector<16x32xf32>, vector<64x32xf32> -> vector<64x32xf32>
    %14 = vector.broadcast %2 : f32 to vector<64x32xf32>
    %15 = arith.addf %13, %14 : vector<64x32xf32>
    %16 = math.tanh %15 : vector<64x32xf32>
    %17 = vector.broadcast %3 : f32 to vector<64x32xf32>
    %18 = arith.mulf %17, %16 : vector<64x32xf32>
    %19 = arith.addf %4, %18 : vector<64x32xf32>
    %c0_8 = arith.constant 0 : index
    %c0_9 = arith.constant 0 : index
    %20 = vector.load %arg5[%c0_8, %c0_9] : memref<64x48xf32, #tpu.memory_space<vmem>>, vector<64x32xf32>
    tpu.vector_store %arg5[%c0_8, %c0_9], %19 {strides = array<i32>} : memref<64x48xf32, #tpu.memory_space<vmem>>, vector<64x32xf32>,
    %c0_10 = arith.constant 0 : index
    %c32_11 = arith.constant 32 : index
    %21 = vector.load %arg5[%c0_10, %c32_11] : memref<64x48xf32, #tpu.memory_space<vmem>>, vector<64x16xf32>
    tpu.vector_store %arg5[%c0_10, %c32_11], %12 {strides = array<i32>} : memref<64x48xf32, #tpu.memory_space<vmem>>, vector<64x16xf32>,
    return
  }
  func.func @transform_0(%arg0: i32) -> (i32, i32) {
    %c0_i32 = arith.constant 0 : i32
    %c0_i32_0 = arith.constant 0 : i32
    return %arg0, %c0_i32 : i32, i32
  }
  func.func @transform_1(%arg0: i32) -> (i32, i32) {
    %c0_i32 = arith.constant 0 : i32
    %c0_i32_0 = arith.constant 0 : i32
    %c0_i32_1 = arith.constant 0 : i32
    return %c0_i32, %c0_i32_0 : i32, i32
  }
  func.func @transform_2(%arg0: i32) -> (i32, i32) {
    %c0_i32 = arith.constant 0 : i32
    %c0_i32_0 = arith.constant 0 : i32
    %c0_i32_1 = arith.constant 0 : i32
    return %c0_i32, %c0_i32_0 : i32, i32
  }
  func.func @transform_3(%arg0: i32) -> i32 {
    %c0_i32 = arith.constant 0 : i32
    %c0_i32_0 = arith.constant 0 : i32
    return %c0_i32 : i32
  }
  func.func @transform_4(%arg0: i32) -> (i32, i32) {
    %c0_i32 = arith.constant 0 : i32
    %c0_i32_0 = arith.constant 0 : i32
    return %arg0, %c0_i32 : i32, i32
  }
}

</mosaic_0001>

<llo_original>
// kernel: tpu_custom_call.1
$region0: #{tpu_custom_call.1}
  #allocation0 [shape = 'u32[]', space=smem, size = 0x4, offset = 0x4, fixed_abs, tag = 'smem constant byte address 0x4 - core index']
  #allocation1 [shape = 'u32[72,128]{1,0:T(1,128)}', space=vmem, size = 0x9000, scoped, tag = 'internal scratch']
  %s0 = inlined_call_operand.vmem [shape: f32[64,48], index: 0, kind: input, shape index: {}]
  %s1 = inlined_call_operand.vmem [shape: f32[32,16], index: 1, kind: input, shape index: {}]
  %s2 = inlined_call_operand.vmem [shape: f32[16,32], index: 2, kind: input, shape index: {}]
  %s3 = inlined_call_operand.vmem [shape: f32[2], index: 3, kind: input, shape index: {}]
  %s4 = inlined_call_operand.vmem [shape: f32[64,48], index: 4, kind: output, shape index: {}]
  %s5 = sld [smem:[#allocation0]]
  $region30: #{tpu_custom_call.1} parent=0
    _
  %s7 = ssub.s32 1, %s5
  %s8 = scalar_select 0, %s7, %s5
  $region1: #{tpu_custom_call.1} parent=0
    #allocation2 [shape = 'u8[512]{0}', space=smem, size = 0x200, scoped, tag = 'input window, operand 3, single buffered']
    #allocation3 [shape = 's32[1]{0}', space=sflag, size = 0x4, scoped, tag = 'scoped memory for tpu_custom_call.1']
    %9 = vsyncpa [#allocation3], 0
    // Predicated region
    $region2: #{tpu_custom_call.1} parent=1 // pred_check
      _
    $region3: #{tpu_custom_call.1} parent=1 // pred_check_branch
      %11 = sbr.rel (0) target = $region5
    $region4: #{tpu_custom_call.1} parent=1 // pred_region
      _
    $region5: #{tpu_custom_call.1} parent=1 // pred_fallthru
      _
    // Predicated region
    $region6: #{tpu_custom_call.1} parent=1 // pred_check
      _
    $region7: #{tpu_custom_call.1} parent=1 // pred_check_branch
      %13 = sbr.rel (0) target = $region9
    $region8: #{tpu_custom_call.1} parent=1 // pred_region
      _
    $region9: #{tpu_custom_call.1} parent=1 // pred_fallthru
      _
    // Predicated region
    $region10: #{tpu_custom_call.1} parent=1 // pred_check
      _
    $region11: #{tpu_custom_call.1} parent=1 // pred_check_branch
      %15 = sbr.rel (0) target = $region13
    $region12: #{tpu_custom_call.1} parent=1 // pred_region
      _
    $region13: #{tpu_custom_call.1} parent=1 // pred_fallthru
      _
    // Predicated region
    $region14: #{tpu_custom_call.1} parent=1 // pred_check
      _
    $region15: #{tpu_custom_call.1} parent=1 // pred_check_branch
      %17 = sbr.rel (0) target = $region17
    $region16: #{tpu_custom_call.1} parent=1 // pred_region
      %19 = vsyncadd [#allocation3], 0
      %s21 = sshll.u32 %s3, 4
      %s22 = int_to_ptr.vmem [resolvable:$true] %s21
      %24 = dma.vmem_to_smem %s22, 16, [#allocation2], [#allocation3]
    $region17: #{tpu_custom_call.1} parent=1 // pred_fallthru
      _
    // Predicated region
    $region18: #{tpu_custom_call.1} parent=1 // pred_check
      _
    $region19: #{tpu_custom_call.1} parent=1 // pred_check_branch
      %26 = sbr.rel (0) target = $region21
    $region20: #{tpu_custom_call.1} parent=1 // pred_region
      %28 = dma.done [#allocation3], 16
    $region21: #{tpu_custom_call.1} parent=1 // pred_fallthru
      _
    %29 = sfence
    %v30 = vld [vmem:[%s1] sm:$0xff]
    %v31 = vld [vmem:[%s1 + $0x8] sm:$0xff]
    %v32 = vld [vmem:[%s1 + $0x10] sm:$0xff]
    %v33 = vld [vmem:[%s1 + $0x18] sm:$0xff]
    %v34 = vld [vmem:[%s2] sm:$0xff]
    %v35 = vld [vmem:[%s2 + $0x8] sm:$0xff]
    %s36 = sld [smem:[#allocation2]]
    %s37 = sld [smem:[#allocation2 + $0x1]]
    %v38 = vld [vmem:[%s0] sm:$0xff]
    %v39 = vld [vmem:[%s0 + $0x8] sm:$0xff]
    %v40 = vld [vmem:[%s0 + $0x10] sm:$0xff]
    %v41 = vld [vmem:[%s0 + $0x18] sm:$0xff]
    %v42 = vld [vmem:[%s0 + $0x20] sm:$0xff]
    %v43 = vld [vmem:[%s0 + $0x28] sm:$0xff]
    %v44 = vld [vmem:[%s0 + $0x30] sm:$0xff]
    %v45 = vld [vmem:[%s0 + $0x38] sm:$0xff]
    %v46 = vstv %s36
    %vm47 = vcmask 261120
    %v49 = vsel %vm47, %v38, 0
    %v52 = vsel %vm47, %v39, 0
    %v55 = vsel %vm47, %v40, 0
    %v58 = vsel %vm47, %v41, 0
    %v61 = vsel %vm47, %v42, 0
    %v64 = vsel %vm47, %v43, 0
    %v67 = vsel %vm47, %v44, 0
    %v70 = vsel %vm47, %v45, 0
    %72 = vmatpush.msra.mxu0 0.0
    %73 = vmatpush.msra.mxu0 0.0
    %74 = vmatpush.msra.mxu0 0.0
    %75 = vmatpush.msra.mxu0 0.0
    %76 = vmatpush.msra.mxu0 0.0
    %77 = vmatpush.msra.mxu0 0.0
    %78 = vmatpush.msra.mxu0 0.0
    %79 = vmatpush.msra.mxu0 0.0
    %80 = vmatpush.msra.mxu0 0.0
    %81 = vmatpush.msra.mxu0 0.0
    %82 = vmatpush.msra.mxu0 0.0
    %83 = vmatpush.msra.mxu0 0.0
    %84 = vmatpush.msra.mxu0 %v33
    %85 = vmatpush.msra.mxu0 %v32
    %86 = vmatpush.msra.mxu0 %v31
    %87 = vmatpush.msra.mxu0 %v30
    %88 = vmatmul.f32.gmra.mxu0 %v49
    %v89 = vpop.f32.mrf.mxu0
    %v90 = vadd.f32 %v46, %v89
    %91 = vmatmul.f32.gmra.mxu0 %v52
    %v92 = vpop.f32.mrf.mxu0
    %v93 = vadd.f32 %v46, %v92
    %94 = vmatmul.f32.gmra.mxu0 %v55
    %v95 = vpop.f32.mrf.mxu0
    %v96 = vadd.f32 %v46, %v95
    %97 = vmatmul.f32.gmra.mxu0 %v58
    %v98 = vpop.f32.mrf.mxu0
    %v99 = vadd.f32 %v46, %v98
    %100 = vmatmul.f32.gmra.mxu0 %v61
    %v101 = vpop.f32.mrf.mxu0
    %v102 = vadd.f32 %v46, %v101
    %103 = vmatmul.f32.gmra.mxu0 %v64
    %v104 = vpop.f32.mrf.mxu0
    %v105 = vadd.f32 %v46, %v104
    %106 = vmatmul.f32.gmra.mxu0 %v67
    %v107 = vpop.f32.mrf.mxu0
    %v108 = vadd.f32 %v46, %v107
    %109 = vmatmul.f32.gmra.mxu0 %v70
    %v110 = vpop.f32.mrf.mxu0
    %v111 = vadd.f32 %v46, %v110
    %112 = vdwg.mxu0
    %v113 = vtanh.pop %v90
    %v114 = vtanh.pop %v93
    %v115 = vtanh.pop %v96
    %v116 = vtanh.pop %v99
    %v117 = vtanh.pop %v102
    %v118 = vtanh.pop %v105
    %v119 = vtanh.pop %v108
    %v120 = vtanh.pop %v111
    %v121 = vstv %s37
    %v122 = vmul.f32 %v121, %v113
    %v123 = vmul.f32 %v121, %v114
    %v124 = vmul.f32 %v121, %v115
    %v125 = vmul.f32 %v121, %v116
    %v126 = vmul.f32 %v121, %v117
    %v127 = vmul.f32 %v121, %v118
    %v128 = vmul.f32 %v121, %v119
    %v129 = vmul.f32 %v121, %v120
    %138 = vrot.lane.b32.xlu0 %v122, 32
    %v139 = vpop.permute.xlu0 %138
    %140 = vrot.lane.b32.xlu0 %v123, 32
    %v141 = vpop.permute.xlu0 %140
    %142 = vrot.lane.b32.xlu0 %v124, 32
    %v143 = vpop.permute.xlu0 %142
    %144 = vrot.lane.b32.xlu0 %v125, 32
    %v145 = vpop.permute.xlu0 %144
    %146 = vrot.lane.b32.xlu0 %v126, 32
    %v147 = vpop.permute.xlu0 %146
    %148 = vrot.lane.b32.xlu0 %v127, 32
    %v149 = vpop.permute.xlu0 %148
    %150 = vrot.lane.b32.xlu0 %v128, 32
    %v151 = vpop.permute.xlu0 %150
    %152 = vrot.lane.b32.xlu0 %v129, 32
    %v153 = vpop.permute.xlu0 %152
    %v162 = vsub.f32 %v38, %v139
    %v163 = vsub.f32 %v39, %v141
    %v164 = vsub.f32 %v40, %v143
    %v165 = vsub.f32 %v41, %v145
    %v166 = vsub.f32 %v42, %v147
    %v167 = vsub.f32 %v43, %v149
    %v168 = vsub.f32 %v44, %v151
    %v169 = vsub.f32 %v45, %v153
    %178 = vrot.lane.b32.xlu0 %v162, 96
    %v179 = vpop.permute.xlu0 %178
    %180 = vrot.lane.b32.xlu0 %v163, 96
    %v181 = vpop.permute.xlu0 %180
    %182 = vrot.lane.b32.xlu0 %v164, 96
    %v183 = vpop.permute.xlu0 %182
    %184 = vrot.lane.b32.xlu0 %v165, 96
    %v185 = vpop.permute.xlu0 %184
    %186 = vrot.lane.b32.xlu0 %v166, 96
    %v187 = vpop.permute.xlu0 %186
    %188 = vrot.lane.b32.xlu0 %v167, 96
    %v189 = vpop.permute.xlu0 %188
    %190 = vrot.lane.b32.xlu0 %v168, 96
    %v191 = vpop.permute.xlu0 %190
    %192 = vrot.lane.b32.xlu0 %v169, 96
    %v193 = vpop.permute.xlu0 %192
    %vm194 = vcmask 130048
    %v195 = vsel %vm194, %v179, 0
    %v197 = vsel %vm194, %v181, 0
    %v199 = vsel %vm194, %v183, 0
    %v201 = vsel %vm194, %v185, 0
    %v203 = vsel %vm194, %v187, 0
    %v205 = vsel %vm194, %v189, 0
    %v207 = vsel %vm194, %v191, 0
    %v209 = vsel %vm194, %v193, 0
    %211 = vmatpush.msra.mxu0 0.0
    %212 = vmatpush.msra.mxu0 0.0
    %213 = vmatpush.msra.mxu0 0.0
    %214 = vmatpush.msra.mxu0 0.0
    %215 = vmatpush.msra.mxu0 0.0
    %216 = vmatpush.msra.mxu0 0.0
    %217 = vmatpush.msra.mxu0 0.0
    %218 = vmatpush.msra.mxu0 0.0
    %219 = vmatpush.msra.mxu0 0.0
    %220 = vmatpush.msra.mxu0 0.0
    %221 = vmatpush.msra.mxu0 0.0
    %222 = vmatpush.msra.mxu0 0.0
    %223 = vmatpush.msra.mxu0 0.0
    %224 = vmatpush.msra.mxu0 0.0
    %225 = vmatpush.msra.mxu0 %v35
    %226 = vmatpush.msra.mxu0 %v34
    %227 = vmatmul.f32.gmra.mxu0 %v195
    %v228 = vpop.f32.mrf.mxu0
    %v229 = vadd.f32 %v46, %v228
    %230 = vmatmul.f32.gmra.mxu0 %v197
    %v231 = vpop.f32.mrf.mxu0
    %v232 = vadd.f32 %v46, %v231
    %233 = vmatmul.f32.gmra.mxu0 %v199
    %v234 = vpop.f32.mrf.mxu0
    %v235 = vadd.f32 %v46, %v234
    %236 = vmatmul.f32.gmra.mxu0 %v201
    %v237 = vpop.f32.mrf.mxu0
    %v238 = vadd.f32 %v46, %v237
    %239 = vmatmul.f32.gmra.mxu0 %v203
    %v240 = vpop.f32.mrf.mxu0
    %v241 = vadd.f32 %v46, %v240
    %242 = vmatmul.f32.gmra.mxu0 %v205
    %v243 = vpop.f32.mrf.mxu0
    %v244 = vadd.f32 %v46, %v243
    %245 = vmatmul.f32.gmra.mxu0 %v207
    %v246 = vpop.f32.mrf.mxu0
    %v247 = vadd.f32 %v46, %v246
    %248 = vmatmul.f32.gmra.mxu0 %v209
    %v249 = vpop.f32.mrf.mxu0
    %v250 = vadd.f32 %v46, %v249
    %251 = vdwg.mxu0
    %v252 = vtanh.pop %v229
    %v253 = vtanh.pop %v232
    %v254 = vtanh.pop %v235
    %v255 = vtanh.pop %v238
    %v256 = vtanh.pop %v241
    %v257 = vtanh.pop %v244
    %v258 = vtanh.pop %v247
    %v259 = vtanh.pop %v250
    %v260 = vmul.f32 %v121, %v252
    %v261 = vmul.f32 %v121, %v253
    %v262 = vmul.f32 %v121, %v254
    %v263 = vmul.f32 %v121, %v255
    %v264 = vmul.f32 %v121, %v256
    %v265 = vmul.f32 %v121, %v257
    %v266 = vmul.f32 %v121, %v258
    %v267 = vmul.f32 %v121, %v259
    %v268 = vadd.f32 %v38, %v260
    %v269 = vadd.f32 %v39, %v261
    %v270 = vadd.f32 %v40, %v262
    %v271 = vadd.f32 %v41, %v263
    %v272 = vadd.f32 %v42, %v264
    %v273 = vadd.f32 %v43, %v265
    %v274 = vadd.f32 %v44, %v266
    %v275 = vadd.f32 %v45, %v267
    %276 = vst.msk [vmem:[%s4] sm:$0xff] %vm47, %v268
    %277 = vst.msk [vmem:[%s4 + $0x8] sm:$0xff] %vm47, %v269
    %278 = vst.msk [vmem:[%s4 + $0x10] sm:$0xff] %vm47, %v270
    %279 = vst.msk [vmem:[%s4 + $0x18] sm:$0xff] %vm47, %v271
    %280 = vst.msk [vmem:[%s4 + $0x20] sm:$0xff] %vm47, %v272
    %281 = vst.msk [vmem:[%s4 + $0x28] sm:$0xff] %vm47, %v273
    %282 = vst.msk [vmem:[%s4 + $0x30] sm:$0xff] %vm47, %v274
    %283 = vst.msk [vmem:[%s4 + $0x38] sm:$0xff] %vm47, %v275
    %vm284 = vcmask 392448
    %285 = vst.msk [vmem:[%s4] sm:$0xff] %vm284, %v162
    %286 = vst.msk [vmem:[%s4 + $0x8] sm:$0xff] %vm284, %v163
    %287 = vst.msk [vmem:[%s4 + $0x10] sm:$0xff] %vm284, %v164
    %288 = vst.msk [vmem:[%s4 + $0x18] sm:$0xff] %vm284, %v165
    %289 = vst.msk [vmem:[%s4 + $0x20] sm:$0xff] %vm284, %v166
    %290 = vst.msk [vmem:[%s4 + $0x28] sm:$0xff] %vm284, %v167
    %291 = vst.msk [vmem:[%s4 + $0x30] sm:$0xff] %vm284, %v168
    %292 = vst.msk [vmem:[%s4 + $0x38] sm:$0xff] %vm284, %v169
    // Predicated region
    $region22: #{tpu_custom_call.1} parent=1 // pred_check
      _
    $region23: #{tpu_custom_call.1} parent=1 // pred_check_branch
      %294 = sbr.rel (0) target = $region25
    $region24: #{tpu_custom_call.1} parent=1 // pred_region
      _
    $region25: #{tpu_custom_call.1} parent=1 // pred_fallthru
      _
    // Predicated region
    $region26: #{tpu_custom_call.1} parent=1 // pred_check
      _
    $region27: #{tpu_custom_call.1} parent=1 // pred_check_branch
      %296 = sbr.rel (0) target = $region29
    $region28: #{tpu_custom_call.1} parent=1 // pred_region
      _
    $region29: #{tpu_custom_call.1} parent=1 // pred_fallthru
      _
    %297 = vsyncpa [#allocation3], 1

// kernel: tpu_custom_call.1
$region0: #{tpu_custom_call.1}
  #allocation0 [shape = 'u32[]', space=smem, size = 0x4, offset = 0x4, fixed_abs, tag = 'smem constant byte address 0x4 - core index']
  #allocation1 [shape = 'u32[72,128]{1,0:T(1,128)}', space=vmem, size = 0x9000, scoped, tag = 'internal scratch']
  %s0 = inlined_call_operand.vmem [shape: f32[64,48], index: 0, kind: input, shape index: {}]
  %s1 = inlined_call_operand.vmem [shape: f32[32,16], index: 1, kind: input, shape index: {}]
  %s2 = inlined_call_operand.vmem [shape: f32[16,32], index: 2, kind: input, shape index: {}]
  %s3 = inlined_call_operand.vmem [shape: f32[2], index: 3, kind: input, shape index: {}]
  %s4 = inlined_call_operand.vmem [shape: f32[64,48], index: 4, kind: output, shape index: {}]
  %s5 = sld [smem:[#allocation0]]
  $region30: #{tpu_custom_call.1} parent=0
    _
  %s7 = ssub.s32 1, %s5
  %s8 = scalar_select 0, %s7, %s5
  $region1: #{tpu_custom_call.1} parent=0
    #allocation2 [shape = 'u8[512]{0}', space=smem, size = 0x200, scoped, tag = 'input window, operand 3, single buffered']
    #allocation3 [shape = 's32[1]{0}', space=sflag, size = 0x4, scoped, tag = 'scoped memory for tpu_custom_call.1']
    %9 = vsyncpa [#allocation3], 0
    // Predicated region
    $region2: #{tpu_custom_call.1} parent=1 // pred_check
      _
    $region3: #{tpu_custom_call.1} parent=1 // pred_check_branch
      %11 = sbr.rel (0) target = $region5
    $region4: #{tpu_custom_call.1} parent=1 // pred_region
      _
    $region5: #{tpu_custom_call.1} parent=1 // pred_fallthru
      _
    // Predicated region
    $region6: #{tpu_custom_call.1} parent=1 // pred_check
      _
    $region7: #{tpu_custom_call.1} parent=1 // pred_check_branch
      %13 = sbr.rel (0) target = $region9
    $region8: #{tpu_custom_call.1} parent=1 // pred_region
      _
    $region9: #{tpu_custom_call.1} parent=1 // pred_fallthru
      _
    // Predicated region
    $region10: #{tpu_custom_call.1} parent=1 // pred_check
      _
    $region11: #{tpu_custom_call.1} parent=1 // pred_check_branch
      %15 = sbr.rel (0) target = $region13
    $region12: #{tpu_custom_call.1} parent=1 // pred_region
      _
    $region13: #{tpu_custom_call.1} parent=1 // pred_fallthru
      _
    // Predicated region
    $region14: #{tpu_custom_call.1} parent=1 // pred_check
      _
    $region15: #{tpu_custom_call.1} parent=1 // pred_check_branch
      %17 = sbr.rel (0) target = $region17
    $region16: #{tpu_custom_call.1} parent=1 // pred_region
      %19 = vsyncadd [#allocation3], 0
      %s21 = sshll.u32 %s3, 4
      %s22 = int_to_ptr.vmem [resolvable:$true] %s21
      %24 = dma.vmem_to_smem %s22, 16, [#allocation2], [#allocation3]
    $region17: #{tpu_custom_call.1} parent=1 // pred_fallthru
      _
    // Predicated region
    $region18: #{tpu_custom_call.1} parent=1 // pred_check
      _
    $region19: #{tpu_custom_call.1} parent=1 // pred_check_branch
      %26 = sbr.rel (0) target = $region21
    $region20: #{tpu_custom_call.1} parent=1 // pred_region
      %28 = dma.done [#allocation3], 16
    $region21: #{tpu_custom_call.1} parent=1 // pred_fallthru
      _
    %29 = sfence
    %v30 = vld [vmem:[%s1] sm:$0xff]
    %v31 = vld [vmem:[%s1 + $0x8] sm:$0xff]
    %v32 = vld [vmem:[%s1 + $0x10] sm:$0xff]
    %v33 = vld [vmem:[%s1 + $0x18] sm:$0xff]
    %v34 = vld [vmem:[%s2] sm:$0xff]
    %v35 = vld [vmem:[%s2 + $0x8] sm:$0xff]
    %s36 = sld [smem:[#allocation2]]
    %s37 = sld [smem:[#allocation2 + $0x1]]
    %v38 = vld [vmem:[%s0] sm:$0xff]
    %v39 = vld [vmem:[%s0 + $0x8] sm:$0xff]
    %v40 = vld [vmem:[%s0 + $0x10] sm:$0xff]
    %v41 = vld [vmem:[%s0 + $0x18] sm:$0xff]
    %v42 = vld [vmem:[%s0 + $0x20] sm:$0xff]
    %v43 = vld [vmem:[%s0 + $0x28] sm:$0xff]
    %v44 = vld [vmem:[%s0 + $0x30] sm:$0xff]
    %v45 = vld [vmem:[%s0 + $0x38] sm:$0xff]
    %v46 = vstv %s36
    %vm47 = vcmask 261120
    %v49 = vsel %vm47, %v38, 0
    %v52 = vsel %vm47, %v39, 0
    %v55 = vsel %vm47, %v40, 0
    %v58 = vsel %vm47, %v41, 0
    %v61 = vsel %vm47, %v42, 0
    %v64 = vsel %vm47, %v43, 0
    %v67 = vsel %vm47, %v44, 0
    %v70 = vsel %vm47, %v45, 0
    %72 = vmatpush.msra.mxu0 0.0
    %73 = vmatpush.msra.mxu0 0.0
    %74 = vmatpush.msra.mxu0 0.0
    %75 = vmatpush.msra.mxu0 0.0
    %76 = vmatpush.msra.mxu0 0.0
    %77 = vmatpush.msra.mxu0 0.0
    %78 = vmatpush.msra.mxu0 0.0
    %79 = vmatpush.msra.mxu0 0.0
    %80 = vmatpush.msra.mxu0 0.0
    %81 = vmatpush.msra.mxu0 0.0
    %82 = vmatpush.msra.mxu0 0.0
    %83 = vmatpush.msra.mxu0 0.0
    %84 = vmatpush.msra.mxu0 %v33
    %85 = vmatpush.msra.mxu0 %v32
    %86 = vmatpush.msra.mxu0 %v31
    %87 = vmatpush.msra.mxu0 %v30
    %88 = vmatmul.f32.gmra.mxu0 %v49
    %v89 = vpop.f32.mrf.mxu0
    %v90 = vadd.f32 %v46, %v89
    %91 = vmatmul.f32.gmra.mxu0 %v52
    %v92 = vpop.f32.mrf.mxu0
    %v93 = vadd.f32 %v46, %v92
    %94 = vmatmul.f32.gmra.mxu0 %v55
    %v95 = vpop.f32.mrf.mxu0
    %v96 = vadd.f32 %v46, %v95
    %97 = vmatmul.f32.gmra.mxu0 %v58
    %v98 = vpop.f32.mrf.mxu0
    %v99 = vadd.f32 %v46, %v98
    %100 = vmatmul.f32.gmra.mxu0 %v61
    %v101 = vpop.f32.mrf.mxu0
    %v102 = vadd.f32 %v46, %v101
    %103 = vmatmul.f32.gmra.mxu0 %v64
    %v104 = vpop.f32.mrf.mxu0
    %v105 = vadd.f32 %v46, %v104
    %106 = vmatmul.f32.gmra.mxu0 %v67
    %v107 = vpop.f32.mrf.mxu0
    %v108 = vadd.f32 %v46, %v107
    %109 = vmatmul.f32.gmra.mxu0 %v70
    %v110 = vpop.f32.mrf.mxu0
    %v111 = vadd.f32 %v46, %v110
    %112 = vdwg.mxu0
    %v113 = vtanh.pop %v90
    %v114 = vtanh.pop %v93
    %v115 = vtanh.pop %v96
    %v116 = vtanh.pop %v99
    %v117 = vtanh.pop %v102
    %v118 = vtanh.pop %v105
    %v119 = vtanh.pop %v108
    %v120 = vtanh.pop %v111
    %v121 = vstv %s37
    %v122 = vmul.f32 %v121, %v113
    %v123 = vmul.f32 %v121, %v114
    %v124 = vmul.f32 %v121, %v115
    %v125 = vmul.f32 %v121, %v116
    %v126 = vmul.f32 %v121, %v117
    %v127 = vmul.f32 %v121, %v118
    %v128 = vmul.f32 %v121, %v119
    %v129 = vmul.f32 %v121, %v120
    %138 = vrot.lane.b32.xlu0 %v122, 32
    %v139 = vpop.permute.xlu0 %138
    %140 = vrot.lane.b32.xlu0 %v123, 32
    %v141 = vpop.permute.xlu0 %140
    %142 = vrot.lane.b32.xlu0 %v124, 32
    %v143 = vpop.permute.xlu0 %142
    %144 = vrot.lane.b32.xlu0 %v125, 32
    %v145 = vpop.permute.xlu0 %144
    %146 = vrot.lane.b32.xlu0 %v126, 32
    %v147 = vpop.permute.xlu0 %146
    %148 = vrot.lane.b32.xlu0 %v127, 32
    %v149 = vpop.permute.xlu0 %148
    %150 = vrot.lane.b32.xlu0 %v128, 32
    %v151 = vpop.permute.xlu0 %150
    %152 = vrot.lane.b32.xlu0 %v129, 32
    %v153 = vpop.permute.xlu0 %152
    %v162 = vsub.f32 %v38, %v139
    %v163 = vsub.f32 %v39, %v141
    %v164 = vsub.f32 %v40, %v143
    %v165 = vsub.f32 %v41, %v145
    %v166 = vsub.f32 %v42, %v147
    %v167 = vsub.f32 %v43, %v149
    %v168 = vsub.f32 %v44, %v151
    %v169 = vsub.f32 %v45, %v153
    %178 = vrot.lane.b32.xlu0 %v162, 96
    %v179 = vpop.permute.xlu0 %178
    %180 = vrot.lane.b32.xlu0 %v163, 96
    %v181 = vpop.permute.xlu0 %180
    %182 = vrot.lane.b32.xlu0 %v164, 96
    %v183 = vpop.permute.xlu0 %182
    %184 = vrot.lane.b32.xlu0 %v165, 96
    %v185 = vpop.permute.xlu0 %184
    %186 = vrot.lane.b32.xlu0 %v166, 96
    %v187 = vpop.permute.xlu0 %186
    %188 = vrot.lane.b32.xlu0 %v167, 96
    %v189 = vpop.permute.xlu0 %188
    %190 = vrot.lane.b32.xlu0 %v168, 96
    %v191 = vpop.permute.xlu0 %190
    %192 = vrot.lane.b32.xlu0 %v169, 96
    %v193 = vpop.permute.xlu0 %192
    %vm194 = vcmask 130048
    %v195 = vsel %vm194, %v179, 0
    %v197 = vsel %vm194, %v181, 0
    %v199 = vsel %vm194, %v183, 0
    %v201 = vsel %vm194, %v185, 0
    %v203 = vsel %vm194, %v187, 0
    %v205 = vsel %vm194, %v189, 0
    %v207 = vsel %vm194, %v191, 0
    %v209 = vsel %vm194, %v193, 0
    %211 = vmatpush.msra.mxu0 0.0
    %212 = vmatpush.msra.mxu0 0.0
    %213 = vmatpush.msra.mxu0 0.0
    %214 = vmatpush.msra.mxu0 0.0
    %215 = vmatpush.msra.mxu0 0.0
    %216 = vmatpush.msra.mxu0 0.0
    %217 = vmatpush.msra.mxu0 0.0
    %218 = vmatpush.msra.mxu0 0.0
    %219 = vmatpush.msra.mxu0 0.0
    %220 = vmatpush.msra.mxu0 0.0
    %221 = vmatpush.msra.mxu0 0.0
    %222 = vmatpush.msra.mxu0 0.0
    %223 = vmatpush.msra.mxu0 0.0
    %224 = vmatpush.msra.mxu0 0.0
    %225 = vmatpush.msra.mxu0 %v35
    %226 = vmatpush.msra.mxu0 %v34
    %227 = vmatmul.f32.gmra.mxu0 %v195
    %v228 = vpop.f32.mrf.mxu0
    %v229 = vadd.f32 %v46, %v228
    %230 = vmatmul.f32.gmra.mxu0 %v197
    %v231 = vpop.f32.mrf.mxu0
    %v232 = vadd.f32 %v46, %v231
    %233 = vmatmul.f32.gmra.mxu0 %v199
    %v234 = vpop.f32.mrf.mxu0
    %v235 = vadd.f32 %v46, %v234
    %236 = vmatmul.f32.gmra.mxu0 %v201
    %v237 = vpop.f32.mrf.mxu0
    %v238 = vadd.f32 %v46, %v237
    %239 = vmatmul.f32.gmra.mxu0 %v203
    %v240 = vpop.f32.mrf.mxu0
    %v241 = vadd.f32 %v46, %v240
    %242 = vmatmul.f32.gmra.mxu0 %v205
    %v243 = vpop.f32.mrf.mxu0
    %v244 = vadd.f32 %v46, %v243
    %245 = vmatmul.f32.gmra.mxu0 %v207
    %v246 = vpop.f32.mrf.mxu0
    %v247 = vadd.f32 %v46, %v246
    %248 = vmatmul.f32.gmra.mxu0 %v209
    %v249 = vpop.f32.mrf.mxu0
    %v250 = vadd.f32 %v46, %v249
    %251 = vdwg.mxu0
    %v252 = vtanh.pop %v229
    %v253 = vtanh.pop %v232
    %v254 = vtanh.pop %v235
    %v255 = vtanh.pop %v238
    %v256 = vtanh.pop %v241
    %v257 = vtanh.pop %v244
    %v258 = vtanh.pop %v247
    %v259 = vtanh.pop %v250
    %v260 = vmul.f32 %v121, %v252
    %v261 = vmul.f32 %v121, %v253
    %v262 = vmul.f32 %v121, %v254
    %v263 = vmul.f32 %v121, %v255
    %v264 = vmul.f32 %v121, %v256
    %v265 = vmul.f32 %v121, %v257
    %v266 = vmul.f32 %v121, %v258
    %v267 = vmul.f32 %v121, %v259
    %v268 = vadd.f32 %v38, %v260
    %v269 = vadd.f32 %v39, %v261
    %v270 = vadd.f32 %v40, %v262
    %v271 = vadd.f32 %v41, %v263
    %v272 = vadd.f32 %v42, %v264
    %v273 = vadd.f32 %v43, %v265
    %v274 = vadd.f32 %v44, %v266
    %v275 = vadd.f32 %v45, %v267
    %276 = vst.msk [vmem:[%s4] sm:$0xff] %vm47, %v268
    %277 = vst.msk [vmem:[%s4 + $0x8] sm:$0xff] %vm47, %v269
    %278 = vst.msk [vmem:[%s4 + $0x10] sm:$0xff] %vm47, %v270
    %279 = vst.msk [vmem:[%s4 + $0x18] sm:$0xff] %vm47, %v271
    %280 = vst.msk [vmem:[%s4 + $0x20] sm:$0xff] %vm47, %v272
    %281 = vst.msk [vmem:[%s4 + $0x28] sm:$0xff] %vm47, %v273
    %282 = vst.msk [vmem:[%s4 + $0x30] sm:$0xff] %vm47, %v274
    %283 = vst.msk [vmem:[%s4 + $0x38] sm:$0xff] %vm47, %v275
    %vm284 = vcmask 392448
    %285 = vst.msk [vmem:[%s4] sm:$0xff] %vm284, %v162
    %286 = vst.msk [vmem:[%s4 + $0x8] sm:$0xff] %vm284, %v163
    %287 = vst.msk [vmem:[%s4 + $0x10] sm:$0xff] %vm284, %v164
    %288 = vst.msk [vmem:[%s4 + $0x18] sm:$0xff] %vm284, %v165
    %289 = vst.msk [vmem:[%s4 + $0x20] sm:$0xff] %vm284, %v166
    %290 = vst.msk [vmem:[%s4 + $0x28] sm:$0xff] %vm284, %v167
    %291 = vst.msk [vmem:[%s4 + $0x30] sm:$0xff] %vm284, %v168
    %292 = vst.msk [vmem:[%s4 + $0x38] sm:$0xff] %vm284, %v169
    // Predicated region
    $region22: #{tpu_custom_call.1} parent=1 // pred_check
      _
    $region23: #{tpu_custom_call.1} parent=1 // pred_check_branch
      %294 = sbr.rel (0) target = $region25
    $region24: #{tpu_custom_call.1} parent=1 // pred_region
      _
    $region25: #{tpu_custom_call.1} parent=1 // pred_fallthru
      _
    // Predicated region
    $region26: #{tpu_custom_call.1} parent=1 // pred_check
      _
    $region27: #{tpu_custom_call.1} parent=1 // pred_check_branch
      %296 = sbr.rel (0) target = $region29
    $region28: #{tpu_custom_call.1} parent=1 // pred_region
      _
    $region29: #{tpu_custom_call.1} parent=1 // pred_fallthru
      _
    %297 = vsyncpa [#allocation3], 1

</llo_original>
